<compile_context>
chip_gen: v5e
topology: v5e:2x2
jax: 0.10.0
libtpu: 0.0.40
codegen_flags: <defaults>
</compile_context>

<pallas_src>
import functools

import numpy as np
import jax
import jax.numpy as jnp
from jax.experimental import pallas as pl
from jax.experimental.pallas import tpu as pltpu


# ----------------------------------------------------------------------------
# Fused kernel: Conv2d (im2col matmul) + ReLU + value Linear + image Linear +
# joint bias/ReLU + concat.  One grid step per TB-row batch tile; everything
# in a transposed (features-on-sublanes, batch-on-lanes) layout.
# ----------------------------------------------------------------------------
def fused_block_kernel(xvT_ref, pT_ref, wcT_ref, bc_ref, wvT_ref, wiT_ref,
                       bcatT_ref, o_ref):
    tb = o_ref.shape[-1]                       # batch-tile width (static)
    hw = pT_ref.shape[-1] // tb                # conv output spatial size Ho*Wo

    # ---- Conv2d as ONE lane-dense im2col matmul:
    #      (Co, K) @ (K, HW*TB) -> (Co, HW*TB); columns ordered (spatial, batch).
    convT = jnp.dot(wcT_ref[...], pT_ref[...],
                    preferred_element_type=jnp.float32)
    convT = jnp.maximum(convT + bc_ref[...], 0.0)      # f32 conv bias + ReLU

    # ---- Regroup the conv activation for the image head: pull each spatial
    #      column block (Co, TB) down onto sublanes -> (HW*Co, TB) with rows
    #      ordered (p, c).  Static lane slices + one sublane concatenate
    #      (vreg-aligned tile copies when TB is a multiple of 128); the image
    #      head weight rows were permuted to the same (p, c) order at prep
    #      time, so no in-kernel transpose is needed.
    conv_flat = jnp.concatenate(
        [convT[:, p * tb:(p + 1) * tb] for p in range(hw)], axis=0)

    # ---- Image head as ONE matmul (old per-channel loop of tiny dots is
    #      gone), widened with zero rows over the value half of the concat:
    #      (Hout, HW*Co) @ (HW*Co, TB) -> (Hout, TB)
    acc = jnp.dot(wiT_ref[...], conv_flat.astype(wiT_ref.dtype),
                  preferred_element_type=jnp.float32)

    # ---- Value head (zero rows over the image half), accumulated into the
    #      same output tile:  (Hout, Dv) @ (Dv, TB)
    acc = acc + jnp.dot(wvT_ref[...], xvT_ref[...],
                        preferred_element_type=jnp.float32)

    # ---- Joint bias + ReLU (equivalent to per-block ReLUs because the two
    #      row ranges are disjoint); single full-tile store.
    o_ref[...] = jnp.maximum(acc + bcatT_ref[...], 0.0)


# ----------------------------------------------------------------------------
# One-time parameter preparation (hoisted out of the per-call forward).
# ----------------------------------------------------------------------------
def prepare_params(params, compute_dtype=jnp.float32):
    wc, bc = params["wc"], params["bc"]          # (Co, Ci, k, k), (Co,)
    wv, bv = params["wv"], params["bv"]          # (Dv, Hv), (Hv,)
    wi, bi = params["wi"], params["bi"]          # (Co*HW, Hi), (Hi,)
    co = wc.shape[0]
    cohw, hi = wi.shape
    hw = cohw // co
    dv, hv = wv.shape

    # conv weight OIHW -> (Co, k*k*Ci); K rows ordered (ki, kj, ci) to match
    # the im2col row order built below.
    wcT = jnp.transpose(wc, (0, 2, 3, 1)).reshape(co, -1).astype(compute_dtype)
    bc_col = bc.reshape(co, 1).astype(jnp.float32)

    # Image head: permute rows from PyTorch NCHW-flatten order (c, p) to the
    # kernel's (p, c) order, transpose, and widen with zero rows over the value
    # half of the concat height Hout = Hv + Hi.  NOTE: the zero rows must stay
    # exactly zero -- that is what makes the shared final bias+ReLU equal to
    # per-block ReLUs.  (At Hout in the hundreds, drop the widening and write
    # the two row ranges with separate dots instead.)
    wi_pc = jnp.transpose(wi.reshape(co, hw, hi), (1, 0, 2)).reshape(cohw, hi)
    wiT_wide = jnp.concatenate(
        [jnp.zeros((hv, cohw), wi.dtype), jnp.transpose(wi_pc)],
        axis=0).astype(compute_dtype)                        # (Hout, HW*Co)

    # Value head: transpose and widen with zero rows over the image half.
    wvT_wide = jnp.concatenate(
        [jnp.transpose(wv), jnp.zeros((hi, dv), wv.dtype)],
        axis=0).astype(compute_dtype)                        # (Hout, Dv)

    bcatT = jnp.concatenate([bv, bi]).reshape(hv + hi, 1).astype(jnp.float32)

    return {"wcT": wcT, "bc_col": bc_col, "wvT_wide": wvT_wide,
            "wiT_wide": wiT_wide, "bcatT": bcatT}


# ----------------------------------------------------------------------------
# im2col glue (pure layout/gather work, kept in XLA).
# ----------------------------------------------------------------------------
def _im2col_lane_dense(x_nchw, k, stride, pad, tb):
    """im2col patches shaped (K, G*HW*TB).

    Rows ordered (ki, kj, ci) to match the OIHW->(Co, K) conv-weight reshape;
    columns ordered (batch-tile g, output spatial p, batch-in-tile b) so every
    grid step reads one contiguous lane-dense block and the in-kernel regroup
    only needs TB-wide lane slices.
    """
    # TODO(synk): move this gather in-kernel (DMA the padded image tile to
    # VMEM, build the k*k taps from static slices) to remove the ~k*k/stride^2
    # (~2.25x) HBM amplification of the patch stream; matters most on v5e/v6e.
    B, Ci, H, W = x_nchw.shape
    G = B // tb
    xp = jnp.pad(x_nchw, ((0, 0), (0, 0), (pad, pad), (pad, pad)))
    Ho = (H + 2 * pad - k) // stride + 1
    Wo = (W + 2 * pad - k) // stride + 1
    taps = [xp[:, :, i:i + stride * Ho:stride, j:j + stride * Wo:stride]
            for i in range(k) for j in range(k)]
    pat = jnp.stack(taps, axis=0)                  # (k*k, B, Ci, Ho, Wo)
    pat = pat.reshape(k * k, G, tb, Ci, Ho * Wo)   # split batch into tiles
    pat = jnp.transpose(pat, (0, 3, 1, 4, 2))      # (k*k, Ci, G, HW, TB)
    return pat.reshape(k * k * Ci, G * Ho * Wo * tb), Ho, Wo


def _choose_batch_tile(batch):
    """Batch sits on the lane axis in-kernel, so interior tiles must be
    multiples of 128.  Small batches run as one full-width grid step (block ==
    full dim, no alignment constraint); large batches use 128/256-row tiles so
    the double-buffered patch block stays small (v7x has 64 MiB VMEM per TC)
    and there are >= 2 'parallel' grid steps for v7x's two TensorCores."""
    if batch < 256:
        return batch
    return 128 if batch <= 512 else 256


# ----------------------------------------------------------------------------
# Full forward: InputMultiBlockConcat.forward(x) with x = (x_value, x_image).
# ----------------------------------------------------------------------------
def input_multi_block_concat_forward(x_value, x_image_nchw, prepped, *,
                                     k=3, stride=2, pad=1,
                                     compute_dtype=jnp.float32):
    B, Dv = x_value.shape
    Co, K = prepped["wcT"].shape
    Hout = prepped["bcatT"].shape[0]

    TB = _choose_batch_tile(B)
    G = pl.cdiv(B, TB)
    Bp = G * TB
    if Bp != B:                                   # pad batch up to whole tiles
        x_value = jnp.pad(x_value, ((0, Bp - B), (0, 0)))
        x_image_nchw = jnp.pad(x_image_nchw,
                               ((0, Bp - B), (0, 0), (0, 0), (0, 0)))

    # Layout-only glue kept in XLA: tiny value-input transpose + im2col gather
    # (cast to compute_dtype first so the dominant patch stream hits HBM at
    # half width on the bf16 path).
    xvT = jnp.transpose(x_value).astype(compute_dtype)             # (Dv, Bp)
    pT, Ho, Wo = _im2col_lane_dense(x_image_nchw.astype(compute_dtype),
                                    k, stride, pad, TB)            # (K, G*HW*TB)
    HW = Ho * Wo

    # Honest per-generation VMEM budget: double-buffered per-step blocks +
    # resident weights + in-kernel f32 intermediates, plus slack.
    itm = jnp.dtype(compute_dtype).itemsize
    blk_bytes = (K * HW * TB + Dv * TB) * itm + Hout * TB * 4
    w_bytes = (Co * K + Dv * Hout + Co * HW * Hout) * itm + (Co + Hout) * 4
    interm_bytes = 2 * Co * HW * TB * 4 + 2 * Hout * TB * 4
    vmem_limit = int(min(32 << 20,
                         max(16 << 20,
                             2 * blk_bytes + 2 * w_bytes + interm_bytes
                             + (4 << 20))))

    flops = 2 * Bp * (Co * K * HW + Hout * (Co * HW + Dv))
    bytes_accessed = int((xvT.size + pT.size) * itm + w_bytes + Hout * Bp * 4)

    outT = pl.pallas_call(
        fused_block_kernel,
        out_shape=jax.ShapeDtypeStruct((Hout, Bp), jnp.float32),
        grid=(G,),
        in_specs=[
            pl.BlockSpec((Dv, TB), lambda g: (0, g)),         # value input^T
            pl.BlockSpec((K, HW * TB), lambda g: (0, g)),     # im2col patches
            pl.BlockSpec((Co, K), lambda g: (0, 0)),          # conv weight^T
            pl.BlockSpec((Co, 1), lambda g: (0, 0)),          # conv bias
            pl.BlockSpec((Hout, Dv), lambda g: (0, 0)),       # value head^T (wide)
            pl.BlockSpec((Hout, Co * HW), lambda g: (0, 0)),  # image head^T (wide)
            pl.BlockSpec((Hout, 1), lambda g: (0, 0)),        # concat bias
        ],
        out_specs=pl.BlockSpec((Hout, TB), lambda g: (0, g)),
        compiler_params=pltpu.CompilerParams(
            dimension_semantics=("parallel",),
            vmem_limit_bytes=vmem_limit),
        cost_estimate=pl.CostEstimate(flops=flops, transcendentals=0,
                                      bytes_accessed=bytes_accessed),
    )(xvT, pT, prepped["wcT"], prepped["bc_col"], prepped["wvT_wide"],
      prepped["wiT_wide"], prepped["bcatT"])

    return jnp.transpose(outT[:, :B])                         # (B, Hout), f32


# ----------------------------------------------------------------------------
# Pure-JAX reference (mirrors the PyTorch forward exactly).
# ----------------------------------------------------------------------------
def reference_forward(x_value, x_image_nchw, params):
    conv = jax.lax.conv_general_dilated(
        x_image_nchw, params["wc"], window_strides=(2, 2),
        padding=((1, 1), (1, 1)),
        dimension_numbers=("NCHW", "OIHW", "NCHW"))
    conv = jax.nn.relu(conv + params["bc"][None, :, None, None])
    img_flat = conv.reshape(conv.shape[0], -1)
    hi = jax.nn.relu(img_flat @ params["wi"] + params["bi"])
    hv = jax.nn.relu(x_value @ params["wv"] + params["bv"])
    return jnp.concatenate([hv, hi], axis=-1)


if __name__ == "__main__":
    # Shapes implied by the module:
    #   space 0: value Box, shape (4,)        -> x_value (B, 4)
    #   space 1: image Box, shape (4, 16, 16) -> x_image (B, 4, 16, 16) NCHW
    Dv = 4
    Ci, H, W = 4, 16, 16
    Co, Kk = 8, 3
    Hid = 32                       # per-block out_size; total out_size = 64

    Ho = (H + 2 - Kk) // 2 + 1
    Wo = (W + 2 - Kk) // 2 + 1
    img_feat = Co * Ho * Wo        # 8*8*8 = 512

    key = jax.random.PRNGKey(0)
    ks = jax.random.split(key, 6)
    params = {
        "wc": 0.1 * jax.random.normal(ks[0], (Co, Ci, Kk, Kk), jnp.float32),
        "bc": 0.1 * jax.random.normal(ks[1], (Co,), jnp.float32),
        "wv": 0.1 * jax.random.normal(ks[2], (Dv, Hid), jnp.float32),
        "bv": 0.1 * jax.random.normal(ks[3], (Hid,), jnp.float32),
        "wi": 0.05 * jax.random.normal(ks[4], (img_feat, Hid), jnp.float32),
        "bi": 0.1 * jax.random.normal(ks[5], (Hid,), jnp.float32),
    }

    def run_case(batch, compute_dtype, rtol, atol, seed):
        kx = jax.random.split(jax.random.PRNGKey(seed), 2)
        x_value = jax.random.normal(kx[0], (batch, Dv), jnp.float32)
        x_image = jax.random.normal(kx[1], (batch, Ci, H, W), jnp.float32)
        prepped = prepare_params(params, compute_dtype=compute_dtype)
        fwd = jax.jit(functools.partial(input_multi_block_concat_forward,
                                        compute_dtype=compute_dtype))
        out = jax.block_until_ready(fwd(x_value, x_image, prepped))
        ref = jax.block_until_ready(reference_forward(x_value, x_image, params))
        assert out.shape == (batch, 2 * Hid), out.shape
        np.testing.assert_allclose(np.asarray(out), np.asarray(ref),
                                   rtol=rtol, atol=atol)

    # Small batch: single full-width grid step, f32 MXU path, tight tolerance.
    run_case(8, jnp.float32, 1e-4, 1e-4, seed=1)
    # Large batch: several lane-aligned 128-row tiles + batch padding
    # (300 -> 384), bf16 MXU operands with f32 accumulation/epilogue.
    run_case(300, jnp.bfloat16, 3e-2, 3e-2, seed=2)

    print("KERNEL_OK")
</pallas_src>

<mosaic_0001>
module attributes {stable_mosaic.version = 11 : i64} {
  func.func @fused_block_kernel(%arg0: i32, %arg1: memref<4x8xf32, #tpu.memory_space<vmem>>, %arg2: memref<36x512xf32, #tpu.memory_space<vmem>>, %arg3: memref<8x36xf32, #tpu.memory_space<vmem>>, %arg4: memref<8x1xf32, #tpu.memory_space<vmem>>, %arg5: memref<64x4xf32, #tpu.memory_space<vmem>>, %arg6: memref<64x512xf32, #tpu.memory_space<vmem>>, %arg7: memref<64x1xf32, #tpu.memory_space<vmem>>, %arg8: memref<64x8xf32, #tpu.memory_space<vmem>>) attributes {dimension_semantics = [#tpu.dimension_semantics<parallel>], iteration_bounds = array<i64: 1>, scalar_prefetch = 0 : i64, scratch_operands = 0 : i64, tpu.core_type = #tpu.core_type<tc>, window_params = [{transform_indices = @transform_0, window_bounds = array<i64: 4, 8>}, {transform_indices = @transform_1, window_bounds = array<i64: 36, 512>}, {pipeline_mode = #tpu.pipeline_mode<synchronous>, transform_indices = @transform_2, window_bounds = array<i64: 8, 36>}, {pipeline_mode = #tpu.pipeline_mode<synchronous>, transform_indices = @transform_3, window_bounds = array<i64: 8, 1>}, {pipeline_mode = #tpu.pipeline_mode<synchronous>, transform_indices = @transform_4, window_bounds = array<i64: 64, 4>}, {pipeline_mode = #tpu.pipeline_mode<synchronous>, transform_indices = @transform_5, window_bounds = array<i64: 64, 512>}, {pipeline_mode = #tpu.pipeline_mode<synchronous>, transform_indices = @transform_6, window_bounds = array<i64: 64, 1>}, {transform_indices = @transform_7, window_bounds = array<i64: 64, 8>}]} {
    %c0 = arith.constant 0 : index
    %c0_0 = arith.constant 0 : index
    %0 = vector.load %arg3[%c0, %c0_0] : memref<8x36xf32, #tpu.memory_space<vmem>>, vector<8x36xf32>
    %c0_1 = arith.constant 0 : index
    %c0_2 = arith.constant 0 : index
    %1 = vector.load %arg2[%c0_1, %c0_2] : memref<36x512xf32, #tpu.memory_space<vmem>>, vector<36x512xf32>
    %cst = arith.constant dense<0.000000e+00> : vector<8x512xf32>
    %2 = tpu.matmul %0, %1, %cst {dimension_numbers = #tpu.dot_dimension_numbers<[1], [0], [0], [1], [0, 0, 1, 1], [], []>} : vector<8x36xf32>, vector<36x512xf32>, vector<8x512xf32> -> vector<8x512xf32>
    %c0_3 = arith.constant 0 : index
    %c0_4 = arith.constant 0 : index
    %3 = vector.load %arg4[%c0_3, %c0_4] : memref<8x1xf32, #tpu.memory_space<vmem>>, vector<8x1xf32>
    %4 = vector.broadcast %3 : vector<8x1xf32> to vector<8x512xf32>
    %5 = arith.addf %2, %4 : vector<8x512xf32>
    %cst_5 = arith.constant 0.000000e+00 : f32
    %6 = vector.broadcast %cst_5 : f32 to vector<8x512xf32>
    %7 = arith.maximumf %5, %6 : vector<8x512xf32>
    %8 = vector.extract_strided_slice %7 {offsets = [0, 0], sizes = [8, 8], strides = [1, 1]} : vector<8x512xf32> to vector<8x8xf32>
    %9 = vector.extract_strided_slice %7 {offsets = [0, 8], sizes = [8, 8], strides = [1, 1]} : vector<8x512xf32> to vector<8x8xf32>
    %10 = vector.extract_strided_slice %7 {offsets = [0, 16], sizes = [8, 8], strides = [1, 1]} : vector<8x512xf32> to vector<8x8xf32>
    %11 = vector.extract_strided_slice %7 {offsets = [0, 24], sizes = [8, 8], strides = [1, 1]} : vector<8x512xf32> to vector<8x8xf32>
    %12 = vector.extract_strided_slice %7 {offsets = [0, 32], sizes = [8, 8], strides = [1, 1]} : vector<8x512xf32> to vector<8x8xf32>
    %13 = vector.extract_strided_slice %7 {offsets = [0, 40], sizes = [8, 8], strides = [1, 1]} : vector<8x512xf32> to vector<8x8xf32>
    %14 = vector.extract_strided_slice %7 {offsets = [0, 48], sizes = [8, 8], strides = [1, 1]} : vector<8x512xf32> to vector<8x8xf32>
    %15 = vector.extract_strided_slice %7 {offsets = [0, 56], sizes = [8, 8], strides = [1, 1]} : vector<8x512xf32> to vector<8x8xf32>
    %16 = vector.extract_strided_slice %7 {offsets = [0, 64], sizes = [8, 8], strides = [1, 1]} : vector<8x512xf32> to vector<8x8xf32>
    %17 = vector.extract_strided_slice %7 {offsets = [0, 72], sizes = [8, 8], strides = [1, 1]} : vector<8x512xf32> to vector<8x8xf32>
    %18 = vector.extract_strided_slice %7 {offsets = [0, 80], sizes = [8, 8], strides = [1, 1]} : vector<8x512xf32> to vector<8x8xf32>
    %19 = vector.extract_strided_slice %7 {offsets = [0, 88], sizes = [8, 8], strides = [1, 1]} : vector<8x512xf32> to vector<8x8xf32>
    %20 = vector.extract_strided_slice %7 {offsets = [0, 96], sizes = [8, 8], strides = [1, 1]} : vector<8x512xf32> to vector<8x8xf32>
    %21 = vector.extract_strided_slice %7 {offsets = [0, 104], sizes = [8, 8], strides = [1, 1]} : vector<8x512xf32> to vector<8x8xf32>
    %22 = vector.extract_strided_slice %7 {offsets = [0, 112], sizes = [8, 8], strides = [1, 1]} : vector<8x512xf32> to vector<8x8xf32>
    %23 = vector.extract_strided_slice %7 {offsets = [0, 120], sizes = [8, 8], strides = [1, 1]} : vector<8x512xf32> to vector<8x8xf32>
    %24 = vector.extract_strided_slice %7 {offsets = [0, 128], sizes = [8, 8], strides = [1, 1]} : vector<8x512xf32> to vector<8x8xf32>
    %25 = vector.extract_strided_slice %7 {offsets = [0, 136], sizes = [8, 8], strides = [1, 1]} : vector<8x512xf32> to vector<8x8xf32>
    %26 = vector.extract_strided_slice %7 {offsets = [0, 144], sizes = [8, 8], strides = [1, 1]} : vector<8x512xf32> to vector<8x8xf32>
    %27 = vector.extract_strided_slice %7 {offsets = [0, 152], sizes = [8, 8], strides = [1, 1]} : vector<8x512xf32> to vector<8x8xf32>
    %28 = vector.extract_strided_slice %7 {offsets = [0, 160], sizes = [8, 8], strides = [1, 1]} : vector<8x512xf32> to vector<8x8xf32>
    %29 = vector.extract_strided_slice %7 {offsets = [0, 168], sizes = [8, 8], strides = [1, 1]} : vector<8x512xf32> to vector<8x8xf32>
    %30 = vector.extract_strided_slice %7 {offsets = [0, 176], sizes = [8, 8], strides = [1, 1]} : vector<8x512xf32> to vector<8x8xf32>
    %31 = vector.extract_strided_slice %7 {offsets = [0, 184], sizes = [8, 8], strides = [1, 1]} : vector<8x512xf32> to vector<8x8xf32>
    %32 = vector.extract_strided_slice %7 {offsets = [0, 192], sizes = [8, 8], strides = [1, 1]} : vector<8x512xf32> to vector<8x8xf32>
    %33 = vector.extract_strided_slice %7 {offsets = [0, 200], sizes = [8, 8], strides = [1, 1]} : vector<8x512xf32> to vector<8x8xf32>
    %34 = vector.extract_strided_slice %7 {offsets = [0, 208], sizes = [8, 8], strides = [1, 1]} : vector<8x512xf32> to vector<8x8xf32>
    %35 = vector.extract_strided_slice %7 {offsets = [0, 216], sizes = [8, 8], strides = [1, 1]} : vector<8x512xf32> to vector<8x8xf32>
    %36 = vector.extract_strided_slice %7 {offsets = [0, 224], sizes = [8, 8], strides = [1, 1]} : vector<8x512xf32> to vector<8x8xf32>
    %37 = vector.extract_strided_slice %7 {offsets = [0, 232], sizes = [8, 8], strides = [1, 1]} : vector<8x512xf32> to vector<8x8xf32>
    %38 = vector.extract_strided_slice %7 {offsets = [0, 240], sizes = [8, 8], strides = [1, 1]} : vector<8x512xf32> to vector<8x8xf32>
    %39 = vector.extract_strided_slice %7 {offsets = [0, 248], sizes = [8, 8], strides = [1, 1]} : vector<8x512xf32> to vector<8x8xf32>
    %40 = vector.extract_strided_slice %7 {offsets = [0, 256], sizes = [8, 8], strides = [1, 1]} : vector<8x512xf32> to vector<8x8xf32>
    %41 = vector.extract_strided_slice %7 {offsets = [0, 264], sizes = [8, 8], strides = [1, 1]} : vector<8x512xf32> to vector<8x8xf32>
    %42 = vector.extract_strided_slice %7 {offsets = [0, 272], sizes = [8, 8], strides = [1, 1]} : vector<8x512xf32> to vector<8x8xf32>
    %43 = vector.extract_strided_slice %7 {offsets = [0, 280], sizes = [8, 8], strides = [1, 1]} : vector<8x512xf32> to vector<8x8xf32>
    %44 = vector.extract_strided_slice %7 {offsets = [0, 288], sizes = [8, 8], strides = [1, 1]} : vector<8x512xf32> to vector<8x8xf32>
    %45 = vector.extract_strided_slice %7 {offsets = [0, 296], sizes = [8, 8], strides = [1, 1]} : vector<8x512xf32> to vector<8x8xf32>
    %46 = vector.extract_strided_slice %7 {offsets = [0, 304], sizes = [8, 8], strides = [1, 1]} : vector<8x512xf32> to vector<8x8xf32>
    %47 = vector.extract_strided_slice %7 {offsets = [0, 312], sizes = [8, 8], strides = [1, 1]} : vector<8x512xf32> to vector<8x8xf32>
    %48 = vector.extract_strided_slice %7 {offsets = [0, 320], sizes = [8, 8], strides = [1, 1]} : vector<8x512xf32> to vector<8x8xf32>
    %49 = vector.extract_strided_slice %7 {offsets = [0, 328], sizes = [8, 8], strides = [1, 1]} : vector<8x512xf32> to vector<8x8xf32>
    %50 = vector.extract_strided_slice %7 {offsets = [0, 336], sizes = [8, 8], strides = [1, 1]} : vector<8x512xf32> to vector<8x8xf32>
    %51 = vector.extract_strided_slice %7 {offsets = [0, 344], sizes = [8, 8], strides = [1, 1]} : vector<8x512xf32> to vector<8x8xf32>
    %52 = vector.extract_strided_slice %7 {offsets = [0, 352], sizes = [8, 8], strides = [1, 1]} : vector<8x512xf32> to vector<8x8xf32>
    %53 = vector.extract_strided_slice %7 {offsets = [0, 360], sizes = [8, 8], strides = [1, 1]} : vector<8x512xf32> to vector<8x8xf32>
    %54 = vector.extract_strided_slice %7 {offsets = [0, 368], sizes = [8, 8], strides = [1, 1]} : vector<8x512xf32> to vector<8x8xf32>
    %55 = vector.extract_strided_slice %7 {offsets = [0, 376], sizes = [8, 8], strides = [1, 1]} : vector<8x512xf32> to vector<8x8xf32>
    %56 = vector.extract_strided_slice %7 {offsets = [0, 384], sizes = [8, 8], strides = [1, 1]} : vector<8x512xf32> to vector<8x8xf32>
    %57 = vector.extract_strided_slice %7 {offsets = [0, 392], sizes = [8, 8], strides = [1, 1]} : vector<8x512xf32> to vector<8x8xf32>
    %58 = vector.extract_strided_slice %7 {offsets = [0, 400], sizes = [8, 8], strides = [1, 1]} : vector<8x512xf32> to vector<8x8xf32>
    %59 = vector.extract_strided_slice %7 {offsets = [0, 408], sizes = [8, 8], strides = [1, 1]} : vector<8x512xf32> to vector<8x8xf32>
    %60 = vector.extract_strided_slice %7 {offsets = [0, 416], sizes = [8, 8], strides = [1, 1]} : vector<8x512xf32> to vector<8x8xf32>
    %61 = vector.extract_strided_slice %7 {offsets = [0, 424], sizes = [8, 8], strides = [1, 1]} : vector<8x512xf32> to vector<8x8xf32>
    %62 = vector.extract_strided_slice %7 {offsets = [0, 432], sizes = [8, 8], strides = [1, 1]} : vector<8x512xf32> to vector<8x8xf32>
    %63 = vector.extract_strided_slice %7 {offsets = [0, 440], sizes = [8, 8], strides = [1, 1]} : vector<8x512xf32> to vector<8x8xf32>
    %64 = vector.extract_strided_slice %7 {offsets = [0, 448], sizes = [8, 8], strides = [1, 1]} : vector<8x512xf32> to vector<8x8xf32>
    %65 = vector.extract_strided_slice %7 {offsets = [0, 456], sizes = [8, 8], strides = [1, 1]} : vector<8x512xf32> to vector<8x8xf32>
    %66 = vector.extract_strided_slice %7 {offsets = [0, 464], sizes = [8, 8], strides = [1, 1]} : vector<8x512xf32> to vector<8x8xf32>
    %67 = vector.extract_strided_slice %7 {offsets = [0, 472], sizes = [8, 8], strides = [1, 1]} : vector<8x512xf32> to vector<8x8xf32>
    %68 = vector.extract_strided_slice %7 {offsets = [0, 480], sizes = [8, 8], strides = [1, 1]} : vector<8x512xf32> to vector<8x8xf32>
    %69 = vector.extract_strided_slice %7 {offsets = [0, 488], sizes = [8, 8], strides = [1, 1]} : vector<8x512xf32> to vector<8x8xf32>
    %70 = vector.extract_strided_slice %7 {offsets = [0, 496], sizes = [8, 8], strides = [1, 1]} : vector<8x512xf32> to vector<8x8xf32>
    %71 = vector.extract_strided_slice %7 {offsets = [0, 504], sizes = [8, 8], strides = [1, 1]} : vector<8x512xf32> to vector<8x8xf32>
    %72 = tpu.concatenate %8, %9, %10, %11, %12, %13, %14, %15, %16, %17, %18, %19, %20, %21, %22, %23 in 0 : vector<8x8xf32>, vector<8x8xf32>, vector<8x8xf32>, vector<8x8xf32>, vector<8x8xf32>, vector<8x8xf32>, vector<8x8xf32>, vector<8x8xf32>, vector<8x8xf32>, vector<8x8xf32>, vector<8x8xf32>, vector<8x8xf32>, vector<8x8xf32>, vector<8x8xf32>, vector<8x8xf32>, vector<8x8xf32> -> vector<128x8xf32>
    %73 = tpu.concatenate %24, %25, %26, %27, %28, %29, %30, %31, %32, %33, %34, %35, %36, %37, %38, %39 in 0 : vector<8x8xf32>, vector<8x8xf32>, vector<8x8xf32>, vector<8x8xf32>, vector<8x8xf32>, vector<8x8xf32>, vector<8x8xf32>, vector<8x8xf32>, vector<8x8xf32>, vector<8x8xf32>, vector<8x8xf32>, vector<8x8xf32>, vector<8x8xf32>, vector<8x8xf32>, vector<8x8xf32>, vector<8x8xf32> -> vector<128x8xf32>
    %74 = tpu.concatenate %40, %41, %42, %43, %44, %45, %46, %47, %48, %49, %50, %51, %52, %53, %54, %55 in 0 : vector<8x8xf32>, vector<8x8xf32>, vector<8x8xf32>, vector<8x8xf32>, vector<8x8xf32>, vector<8x8xf32>, vector<8x8xf32>, vector<8x8xf32>, vector<8x8xf32>, vector<8x8xf32>, vector<8x8xf32>, vector<8x8xf32>, vector<8x8xf32>, vector<8x8xf32>, vector<8x8xf32>, vector<8x8xf32> -> vector<128x8xf32>
    %75 = tpu.concatenate %56, %57, %58, %59, %60, %61, %62, %63, %64, %65, %66, %67, %68, %69, %70, %71 in 0 : vector<8x8xf32>, vector<8x8xf32>, vector<8x8xf32>, vector<8x8xf32>, vector<8x8xf32>, vector<8x8xf32>, vector<8x8xf32>, vector<8x8xf32>, vector<8x8xf32>, vector<8x8xf32>, vector<8x8xf32>, vector<8x8xf32>, vector<8x8xf32>, vector<8x8xf32>, vector<8x8xf32>, vector<8x8xf32> -> vector<128x8xf32>
    %76 = tpu.concatenate %72, %73, %74, %75 in 0 : vector<128x8xf32>, vector<128x8xf32>, vector<128x8xf32>, vector<128x8xf32> -> vector<512x8xf32>
    %c0_6 = arith.constant 0 : index
    %c0_7 = arith.constant 0 : index
    %77 = vector.load %arg6[%c0_6, %c0_7] : memref<64x512xf32, #tpu.memory_space<vmem>>, vector<64x512xf32>
    %cst_8 = arith.constant dense<0.000000e+00> : vector<64x8xf32>
    %78 = tpu.matmul %77, %76, %cst_8 {dimension_numbers = #tpu.dot_dimension_numbers<[1], [0], [0], [1], [0, 0, 1, 1], [], []>} : vector<64x512xf32>, vector<512x8xf32>, vector<64x8xf32> -> vector<64x8xf32>
    %c0_9 = arith.constant 0 : index
    %c0_10 = arith.constant 0 : index
    %79 = vector.load %arg5[%c0_9, %c0_10] : memref<64x4xf32, #tpu.memory_space<vmem>>, vector<64x4xf32>
    %c0_11 = arith.constant 0 : index
    %c0_12 = arith.constant 0 : index
    %80 = vector.load %arg1[%c0_11, %c0_12] : memref<4x8xf32, #tpu.memory_space<vmem>>, vector<4x8xf32>
    %cst_13 = arith.constant dense<0.000000e+00> : vector<64x8xf32>
    %81 = tpu.matmul %79, %80, %cst_13 {dimension_numbers = #tpu.dot_dimension_numbers<[1], [0], [0], [1], [0, 0, 1, 1], [], []>} : vector<64x4xf32>, vector<4x8xf32>, vector<64x8xf32> -> vector<64x8xf32>
    %82 = arith.addf %78, %81 : vector<64x8xf32>
    %c0_14 = arith.constant 0 : index
    %c0_15 = arith.constant 0 : index
    %83 = vector.load %arg7[%c0_14, %c0_15] : memref<64x1xf32, #tpu.memory_space<vmem>>, vector<64x1xf32>
    %84 = vector.broadcast %83 : vector<64x1xf32> to vector<64x8xf32>
    %85 = arith.addf %82, %84 : vector<64x8xf32>
    %cst_16 = arith.constant 0.000000e+00 : f32
    %86 = vector.broadcast %cst_16 : f32 to vector<64x8xf32>
    %87 = arith.maximumf %85, %86 : vector<64x8xf32>
    %c0_17 = arith.constant 0 : index
    %c0_18 = arith.constant 0 : index
    %88 = vector.load %arg8[%c0_17, %c0_18] : memref<64x8xf32, #tpu.memory_space<vmem>>, vector<64x8xf32>
    tpu.vector_store %arg8[%c0_17, %c0_18], %87 {strides = array<i32>} : memref<64x8xf32, #tpu.memory_space<vmem>>, vector<64x8xf32>,
    return
  }
  func.func @transform_0(%arg0: i32) -> (i32, i32) {
    %c0_i32 = arith.constant 0 : i32
    %c0_i32_0 = arith.constant 0 : i32
    return %c0_i32, %arg0 : i32, i32
  }
  func.func @transform_1(%arg0: i32) -> (i32, i32) {
    %c0_i32 = arith.constant 0 : i32
    %c0_i32_0 = arith.constant 0 : i32
    return %c0_i32, %arg0 : i32, i32
  }
  func.func @transform_2(%arg0: i32) -> (i32, i32) {
    %c0_i32 = arith.constant 0 : i32
    %c0_i32_0 = arith.constant 0 : i32
    %c0_i32_1 = arith.constant 0 : i32
    return %c0_i32, %c0_i32_0 : i32, i32
  }
  func.func @transform_3(%arg0: i32) -> (i32, i32) {
    %c0_i32 = arith.constant 0 : i32
    %c0_i32_0 = arith.constant 0 : i32
    %c0_i32_1 = arith.constant 0 : i32
    return %c0_i32, %c0_i32_0 : i32, i32
  }
  func.func @transform_4(%arg0: i32) -> (i32, i32) {
    %c0_i32 = arith.constant 0 : i32
    %c0_i32_0 = arith.constant 0 : i32
    %c0_i32_1 = arith.constant 0 : i32
    return %c0_i32, %c0_i32_0 : i32, i32
  }
  func.func @transform_5(%arg0: i32) -> (i32, i32) {
    %c0_i32 = arith.constant 0 : i32
    %c0_i32_0 = arith.constant 0 : i32
    %c0_i32_1 = arith.constant 0 : i32
    return %c0_i32, %c0_i32_0 : i32, i32
  }
  func.func @transform_6(%arg0: i32) -> (i32, i32) {
    %c0_i32 = arith.constant 0 : i32
    %c0_i32_0 = arith.constant 0 : i32
    %c0_i32_1 = arith.constant 0 : i32
    return %c0_i32, %c0_i32_0 : i32, i32
  }
  func.func @transform_7(%arg0: i32) -> (i32, i32) {
    %c0_i32 = arith.constant 0 : i32
    %c0_i32_0 = arith.constant 0 : i32
    return %c0_i32, %arg0 : i32, i32
  }
}

</mosaic_0001>

<llo_original>
// kernel: input_multi_block_concat_forward.1
$region0: #{input_multi_block_concat_forward.1}
  #allocation0 [shape = 'u32[]', space=smem, size = 0x4, offset = 0x4, fixed_abs, tag = 'smem constant byte address 0x4 - core index']
  #allocation1 [shape = 'u32[72,128]{1,0:T(1,128)}', space=vmem, size = 0x9000, scoped, tag = 'internal scratch']
  %s0 = inlined_call_operand.vmem [shape: f32[4,8], index: 0, kind: input, shape index: {}]
  %s1 = inlined_call_operand.vmem [shape: f32[36,512], index: 1, kind: input, shape index: {}]
  %s2 = inlined_call_operand.vmem [shape: f32[8,36], index: 2, kind: input, shape index: {}]
  %s3 = inlined_call_operand.vmem [shape: f32[8,1], index: 3, kind: input, shape index: {}]
  %s4 = inlined_call_operand.vmem [shape: f32[64,4], index: 4, kind: input, shape index: {}]
  %s5 = inlined_call_operand.vmem [shape: f32[64,512], index: 5, kind: input, shape index: {}]
  %s6 = inlined_call_operand.vmem [shape: f32[64,1], index: 6, kind: input, shape index: {}]
  %s7 = inlined_call_operand.vmem [shape: f32[64,8], index: 7, kind: output, shape index: {}]
  %s8 = sld [smem:[#allocation0]]
  $region38: #{input_multi_block_concat_forward.1} parent=0
    _
  %s10 = ssub.s32 1, %s8
  %s11 = scalar_select 0, %s10, %s8
  // Predicated region
  $region2: #{input_multi_block_concat_forward.1} parent=0 // pred_check
    _
  $region3: #{input_multi_block_concat_forward.1} parent=0 // pred_check_branch
    %13 = sbr.rel (0) target = $region5
  $region4: #{input_multi_block_concat_forward.1} parent=0 // pred_region
    _
  $region5: #{input_multi_block_concat_forward.1} parent=0 // pred_fallthru
    _
  // Predicated region
  $region6: #{input_multi_block_concat_forward.1} parent=0 // pred_check
    _
  $region7: #{input_multi_block_concat_forward.1} parent=0 // pred_check_branch
    %15 = sbr.rel (0) target = $region9
  $region8: #{input_multi_block_concat_forward.1} parent=0 // pred_region
    _
  $region9: #{input_multi_block_concat_forward.1} parent=0 // pred_fallthru
    _
  // Predicated region
  $region10: #{input_multi_block_concat_forward.1} parent=0 // pred_check
    _
  $region11: #{input_multi_block_concat_forward.1} parent=0 // pred_check_branch
    %17 = sbr.rel (0) target = $region13
  $region12: #{input_multi_block_concat_forward.1} parent=0 // pred_region
    _
  $region13: #{input_multi_block_concat_forward.1} parent=0 // pred_fallthru
    _
  // Predicated region
  $region14: #{input_multi_block_concat_forward.1} parent=0 // pred_check
    _
  $region15: #{input_multi_block_concat_forward.1} parent=0 // pred_check_branch
    %19 = sbr.rel (0) target = $region17
  $region16: #{input_multi_block_concat_forward.1} parent=0 // pred_region
    _
  $region17: #{input_multi_block_concat_forward.1} parent=0 // pred_fallthru
    _
  // Predicated region
  $region18: #{input_multi_block_concat_forward.1} parent=0 // pred_check
    _
  $region19: #{input_multi_block_concat_forward.1} parent=0 // pred_check_branch
    %21 = sbr.rel (0) target = $region21
  $region20: #{input_multi_block_concat_forward.1} parent=0 // pred_region
    _
  $region21: #{input_multi_block_concat_forward.1} parent=0 // pred_fallthru
    _
  // Predicated region
  $region22: #{input_multi_block_concat_forward.1} parent=0 // pred_check
    _
  $region23: #{input_multi_block_concat_forward.1} parent=0 // pred_check_branch
    %23 = sbr.rel (0) target = $region25
  $region24: #{input_multi_block_concat_forward.1} parent=0 // pred_region
    _
  $region25: #{input_multi_block_concat_forward.1} parent=0 // pred_fallthru
    _
  // Predicated region
  $region26: #{input_multi_block_concat_forward.1} parent=0 // pred_check
    _
  $region27: #{input_multi_block_concat_forward.1} parent=0 // pred_check_branch
    %25 = sbr.rel (0) target = $region29
  $region28: #{input_multi_block_concat_forward.1} parent=0 // pred_region
    _
  $region29: #{input_multi_block_concat_forward.1} parent=0 // pred_fallthru
    _
  %v26 = vld [vmem:[%s2] sm:$0xff]
  %v27 = vld [vmem:[%s1] sm:$0xff]
  %v28 = vld [vmem:[%s1 + $0x8] sm:$0xff]
  %v29 = vld [vmem:[%s1 + $0x10] sm:$0xff]
  %v30 = vld [vmem:[%s1 + $0x18] sm:$0xff]
  %v31 = vld [vmem:[%s1 + $0x20] sm:$0xff]
  %v32 = vld [vmem:[%s1 + $0x28] sm:$0xff]
  %v33 = vld [vmem:[%s1 + $0x30] sm:$0xff]
  %v34 = vld [vmem:[%s1 + $0x38] sm:$0xff]
  %v35 = vld [vmem:[%s1 + $0x40] sm:$0xff]
  %v36 = vld [vmem:[%s1 + $0x48] sm:$0xff]
  %v37 = vld [vmem:[%s1 + $0x50] sm:$0xff]
  %v38 = vld [vmem:[%s1 + $0x58] sm:$0xff]
  %v39 = vld [vmem:[%s1 + $0x60] sm:$0xff]
  %v40 = vld [vmem:[%s1 + $0x68] sm:$0xff]
  %v41 = vld [vmem:[%s1 + $0x70] sm:$0xff]
  %v42 = vld [vmem:[%s1 + $0x78] sm:$0xff]
  %v43 = vld [vmem:[%s1 + $0x80] sm:$0xf]
  %v44 = vld [vmem:[%s1 + $0x88] sm:$0xf]
  %v45 = vld [vmem:[%s1 + $0x90] sm:$0xf]
  %v46 = vld [vmem:[%s1 + $0x98] sm:$0xf]
  %v47 = vld [vmem:[%s3] sm:$0xff]
  %49 = vset.pattern.permute.xlu0 0
  %50 = vperm.xlu0 %49, %v47
  %v51 = vpop.permute.xlu0 %50
  %vm53 = vcmask 293888
  %v55 = vsel %vm53, %v26, 0
  %vm57 = vcmask 1043456
  %v59 = vsel %vm57, %v43, 0
  %v62 = vsel %vm57, %v44, 0
  %v65 = vsel %vm57, %v45, 0
  %v68 = vsel %vm57, %v46, 0
  %70 = vmatpush.msra.mxu0 0.0
  %71 = vmatpush.msra.mxu0 0.0
  %72 = vmatpush.msra.mxu0 0.0
  %73 = vmatpush.msra.mxu0 0.0
  %74 = vmatpush.msra.mxu0 0.0
  %75 = vmatpush.msra.mxu0 0.0
  %76 = vmatpush.msra.mxu0 0.0
  %77 = vmatpush.msra.mxu0 0.0
  %78 = vmatpush.msra.mxu0 0.0
  %79 = vmatpush.msra.mxu0 0.0
  %80 = vmatpush.msra.mxu0 0.0
  %81 = vmatpush.msra.mxu0 %v59
  %82 = vmatpush.msra.mxu0 %v39
  %83 = vmatpush.msra.mxu0 %v35
  %84 = vmatpush.msra.mxu0 %v31
  %85 = vmatpush.msra.mxu0 %v27
  %86 = vmatmul.f32.gmra.mxu0 %v55
  %v87 = vpop.f32.mrf.mxu0
  %v88 = vadd.f32 %v51, %v87
  %89 = vdwg.mxu0
  %90 = vmatpush.msra.mxu0 0.0
  %91 = vmatpush.msra.mxu0 0.0
  %92 = vmatpush.msra.mxu0 0.0
  %93 = vmatpush.msra.mxu0 0.0
  %94 = vmatpush.msra.mxu0 0.0
  %95 = vmatpush.msra.mxu0 0.0
  %96 = vmatpush.msra.mxu0 0.0
  %97 = vmatpush.msra.mxu0 0.0
  %98 = vmatpush.msra.mxu0 0.0
  %99 = vmatpush.msra.mxu0 0.0
  %100 = vmatpush.msra.mxu0 0.0
  %101 = vmatpush.msra.mxu0 %v62
  %102 = vmatpush.msra.mxu0 %v40
  %103 = vmatpush.msra.mxu0 %v36
  %104 = vmatpush.msra.mxu0 %v32
  %105 = vmatpush.msra.mxu0 %v28
  %106 = vmatmul.f32.gmra.mxu0 %v55
  %v107 = vpop.f32.mrf.mxu0
  %v108 = vadd.f32 %v51, %v107
  %109 = vdwg.mxu0
  %110 = vmatpush.msra.mxu0 0.0
  %111 = vmatpush.msra.mxu0 0.0
  %112 = vmatpush.msra.mxu0 0.0
  %113 = vmatpush.msra.mxu0 0.0
  %114 = vmatpush.msra.mxu0 0.0
  %115 = vmatpush.msra.mxu0 0.0
  %116 = vmatpush.msra.mxu0 0.0
  %117 = vmatpush.msra.mxu0 0.0
  %118 = vmatpush.msra.mxu0 0.0
  %119 = vmatpush.msra.mxu0 0.0
  %120 = vmatpush.msra.mxu0 0.0
  %121 = vmatpush.msra.mxu0 %v65
  %122 = vmatpush.msra.mxu0 %v41
  %123 = vmatpush.msra.mxu0 %v37
  %124 = vmatpush.msra.mxu0 %v33
  %125 = vmatpush.msra.mxu0 %v29
  %126 = vmatmul.f32.gmra.mxu0 %v55
  %v127 = vpop.f32.mrf.mxu0
  %v128 = vadd.f32 %v51, %v127
  %129 = vdwg.mxu0
  %130 = vmatpush.msra.mxu0 0.0
  %131 = vmatpush.msra.mxu0 0.0
  %132 = vmatpush.msra.mxu0 0.0
  %133 = vmatpush.msra.mxu0 0.0
  %134 = vmatpush.msra.mxu0 0.0
  %135 = vmatpush.msra.mxu0 0.0
  %136 = vmatpush.msra.mxu0 0.0
  %137 = vmatpush.msra.mxu0 0.0
  %138 = vmatpush.msra.mxu0 0.0
  %139 = vmatpush.msra.mxu0 0.0
  %140 = vmatpush.msra.mxu0 0.0
  %141 = vmatpush.msra.mxu0 %v68
  %142 = vmatpush.msra.mxu0 %v42
  %143 = vmatpush.msra.mxu0 %v38
  %144 = vmatpush.msra.mxu0 %v34
  %145 = vmatpush.msra.mxu0 %v30
  %146 = vmatmul.f32.gmra.mxu0 %v55
  %v147 = vpop.f32.mrf.mxu0
  %v148 = vadd.f32 %v51, %v147
  %149 = vdwg.mxu0
  %v150 = vmax.f32 %v88, 0.0
  %v151 = vmax.f32 %v108, 0.0
  %v152 = vmax.f32 %v128, 0.0
  %v153 = vmax.f32 %v148, 0.0
  %155 = vrot.lane.b32.xlu0 %v150, 120
  %v156 = vpop.permute.xlu0 %155
  %158 = vrot.lane.b32.xlu0 %v150, 112
  %v159 = vpop.permute.xlu0 %158
  %161 = vrot.lane.b32.xlu0 %v150, 104
  %v162 = vpop.permute.xlu0 %161
  %164 = vrot.lane.b32.xlu0 %v150, 96
  %v165 = vpop.permute.xlu0 %164
  %167 = vrot.lane.b32.xlu0 %v150, 88
  %v168 = vpop.permute.xlu0 %167
  %170 = vrot.lane.b32.xlu0 %v150, 80
  %v171 = vpop.permute.xlu0 %170
  %173 = vrot.lane.b32.xlu0 %v150, 72
  %v174 = vpop.permute.xlu0 %173
  %176 = vrot.lane.b32.xlu0 %v150, 64
  %v177 = vpop.permute.xlu0 %176
  %179 = vrot.lane.b32.xlu0 %v150, 56
  %v180 = vpop.permute.xlu0 %179
  %182 = vrot.lane.b32.xlu0 %v150, 48
  %v183 = vpop.permute.xlu0 %182
  %185 = vrot.lane.b32.xlu0 %v150, 40
  %v186 = vpop.permute.xlu0 %185
  %188 = vrot.lane.b32.xlu0 %v150, 32
  %v189 = vpop.permute.xlu0 %188
  %191 = vrot.lane.b32.xlu0 %v150, 24
  %v192 = vpop.permute.xlu0 %191
  %194 = vrot.lane.b32.xlu0 %v150, 16
  %v195 = vpop.permute.xlu0 %194
  %197 = vrot.lane.b32.xlu0 %v150, 8
  %v198 = vpop.permute.xlu0 %197
  %201 = vrot.lane.b32.xlu0 %v151, 120
  %v202 = vpop.permute.xlu0 %201
  %204 = vrot.lane.b32.xlu0 %v151, 112
  %v205 = vpop.permute.xlu0 %204
  %207 = vrot.lane.b32.xlu0 %v151, 104
  %v208 = vpop.permute.xlu0 %207
  %210 = vrot.lane.b32.xlu0 %v151, 96
  %v211 = vpop.permute.xlu0 %210
  %213 = vrot.lane.b32.xlu0 %v151, 88
  %v214 = vpop.permute.xlu0 %213
  %216 = vrot.lane.b32.xlu0 %v151, 80
  %v217 = vpop.permute.xlu0 %216
  %219 = vrot.lane.b32.xlu0 %v151, 72
  %v220 = vpop.permute.xlu0 %219
  %222 = vrot.lane.b32.xlu0 %v151, 64
  %v223 = vpop.permute.xlu0 %222
  %225 = vrot.lane.b32.xlu0 %v151, 56
  %v226 = vpop.permute.xlu0 %225
  %228 = vrot.lane.b32.xlu0 %v151, 48
  %v229 = vpop.permute.xlu0 %228
  %231 = vrot.lane.b32.xlu0 %v151, 40
  %v232 = vpop.permute.xlu0 %231
  %234 = vrot.lane.b32.xlu0 %v151, 32
  %v235 = vpop.permute.xlu0 %234
  %237 = vrot.lane.b32.xlu0 %v151, 24
  %v238 = vpop.permute.xlu0 %237
  %240 = vrot.lane.b32.xlu0 %v151, 16
  %v241 = vpop.permute.xlu0 %240
  %243 = vrot.lane.b32.xlu0 %v151, 8
  %v244 = vpop.permute.xlu0 %243
  %247 = vrot.lane.b32.xlu0 %v152, 120
  %v248 = vpop.permute.xlu0 %247
  %250 = vrot.lane.b32.xlu0 %v152, 112
  %v251 = vpop.permute.xlu0 %250
  %253 = vrot.lane.b32.xlu0 %v152, 104
  %v254 = vpop.permute.xlu0 %253
  %256 = vrot.lane.b32.xlu0 %v152, 96
  %v257 = vpop.permute.xlu0 %256
  %259 = vrot.lane.b32.xlu0 %v152, 88
  %v260 = vpop.permute.xlu0 %259
  %262 = vrot.lane.b32.xlu0 %v152, 80
  %v263 = vpop.permute.xlu0 %262
  %265 = vrot.lane.b32.xlu0 %v152, 72
  %v266 = vpop.permute.xlu0 %265
  %268 = vrot.lane.b32.xlu0 %v152, 64
  %v269 = vpop.permute.xlu0 %268
  %271 = vrot.lane.b32.xlu0 %v152, 56
  %v272 = vpop.permute.xlu0 %271
  %274 = vrot.lane.b32.xlu0 %v152, 48
  %v275 = vpop.permute.xlu0 %274
  %277 = vrot.lane.b32.xlu0 %v152, 40
  %v278 = vpop.permute.xlu0 %277
  %280 = vrot.lane.b32.xlu0 %v152, 32
  %v281 = vpop.permute.xlu0 %280
  %283 = vrot.lane.b32.xlu0 %v152, 24
  %v284 = vpop.permute.xlu0 %283
  %286 = vrot.lane.b32.xlu0 %v152, 16
  %v287 = vpop.permute.xlu0 %286
  %289 = vrot.lane.b32.xlu0 %v152, 8
  %v290 = vpop.permute.xlu0 %289
  %293 = vrot.lane.b32.xlu0 %v153, 120
  %v294 = vpop.permute.xlu0 %293
  %296 = vrot.lane.b32.xlu0 %v153, 112
  %v297 = vpop.permute.xlu0 %296
  %299 = vrot.lane.b32.xlu0 %v153, 104
  %v300 = vpop.permute.xlu0 %299
  %302 = vrot.lane.b32.xlu0 %v153, 96
  %v303 = vpop.permute.xlu0 %302
  %305 = vrot.lane.b32.xlu0 %v153, 88
  %v306 = vpop.permute.xlu0 %305
  %308 = vrot.lane.b32.xlu0 %v153, 80
  %v309 = vpop.permute.xlu0 %308
  %311 = vrot.lane.b32.xlu0 %v153, 72
  %v312 = vpop.permute.xlu0 %311
  %314 = vrot.lane.b32.xlu0 %v153, 64
  %v315 = vpop.permute.xlu0 %314
  %317 = vrot.lane.b32.xlu0 %v153, 56
  %v318 = vpop.permute.xlu0 %317
  %320 = vrot.lane.b32.xlu0 %v153, 48
  %v321 = vpop.permute.xlu0 %320
  %323 = vrot.lane.b32.xlu0 %v153, 40
  %v324 = vpop.permute.xlu0 %323
  %326 = vrot.lane.b32.xlu0 %v153, 32
  %v327 = vpop.permute.xlu0 %326
  %329 = vrot.lane.b32.xlu0 %v153, 24
  %v330 = vpop.permute.xlu0 %329
  %332 = vrot.lane.b32.xlu0 %v153, 16
  %v333 = vpop.permute.xlu0 %332
  %335 = vrot.lane.b32.xlu0 %v153, 8
  %v336 = vpop.permute.xlu0 %335
  %v338 = vld [vmem:[%s5] sm:$0xff]
  %v339 = vld [vmem:[%s5 + $0x8] sm:$0xff]
  %v340 = vld [vmem:[%s5 + $0x10] sm:$0xff]
  %v341 = vld [vmem:[%s5 + $0x18] sm:$0xff]
  %v342 = vld [vmem:[%s5 + $0x20] sm:$0xff]
  %v343 = vld [vmem:[%s5 + $0x28] sm:$0xff]
  %v344 = vld [vmem:[%s5 + $0x30] sm:$0xff]
  %v345 = vld [vmem:[%s5 + $0x38] sm:$0xff]
  %v346 = vld [vmem:[%s5 + $0x40] sm:$0xff]
  %v347 = vld [vmem:[%s5 + $0x48] sm:$0xff]
  %v348 = vld [vmem:[%s5 + $0x50] sm:$0xff]
  %v349 = vld [vmem:[%s5 + $0x58] sm:$0xff]
  %v350 = vld [vmem:[%s5 + $0x60] sm:$0xff]
  %v351 = vld [vmem:[%s5 + $0x68] sm:$0xff]
  %v352 = vld [vmem:[%s5 + $0x70] sm:$0xff]
  %v353 = vld [vmem:[%s5 + $0x78] sm:$0xff]
  %v354 = vld [vmem:[%s5 + $0x80] sm:$0xff]
  %v355 = vld [vmem:[%s5 + $0x88] sm:$0xff]
  %v356 = vld [vmem:[%s5 + $0x90] sm:$0xff]
  %v357 = vld [vmem:[%s5 + $0x98] sm:$0xff]
  %v358 = vld [vmem:[%s5 + $0xa0] sm:$0xff]
  %v359 = vld [vmem:[%s5 + $0xa8] sm:$0xff]
  %v360 = vld [vmem:[%s5 + $0xb0] sm:$0xff]
  %v361 = vld [vmem:[%s5 + $0xb8] sm:$0xff]
  %v362 = vld [vmem:[%s5 + $0xc0] sm:$0xff]
  %v363 = vld [vmem:[%s5 + $0xc8] sm:$0xff]
  %v364 = vld [vmem:[%s5 + $0xd0] sm:$0xff]
  %v365 = vld [vmem:[%s5 + $0xd8] sm:$0xff]
  %v366 = vld [vmem:[%s5 + $0xe0] sm:$0xff]
  %v367 = vld [vmem:[%s5 + $0xe8] sm:$0xff]
  %v368 = vld [vmem:[%s5 + $0xf0] sm:$0xff]
  %v369 = vld [vmem:[%s5 + $0xf8] sm:$0xff]
  %v370 = vld [vmem:[%s4] sm:$0xff]
  %v371 = vld [vmem:[%s4 + $0x8] sm:$0xff]
  %v372 = vld [vmem:[%s4 + $0x10] sm:$0xff]
  %v373 = vld [vmem:[%s4 + $0x18] sm:$0xff]
  %v374 = vld [vmem:[%s4 + $0x20] sm:$0xff]
  %v375 = vld [vmem:[%s4 + $0x28] sm:$0xff]
  %v376 = vld [vmem:[%s4 + $0x30] sm:$0xff]
  %v377 = vld [vmem:[%s4 + $0x38] sm:$0xff]
  %v378 = vld [vmem:[%s0] sm:$0xf]
  %vm379 = vcmask 31744
  %v381 = vsel %vm379, %v370, 0
  %v384 = vsel %vm379, %v371, 0
  %v387 = vsel %vm379, %v372, 0
  %v390 = vsel %vm379, %v373, 0
  %v393 = vsel %vm379, %v374, 0
  %v396 = vsel %vm379, %v375, 0
  %v399 = vsel %vm379, %v376, 0
  %v402 = vsel %vm379, %v377, 0
  %v405 = vsel %vm57, %v378, 0
  %407 = vmatpush.msra.mxu0 0.0
  %408 = vmatpush.msra.mxu0 0.0
  %409 = vmatpush.msra.mxu0 0.0
  %410 = vmatpush.msra.mxu0 0.0
  %411 = vmatpush.msra.mxu0 0.0
  %412 = vmatpush.msra.mxu0 0.0
  %413 = vmatpush.msra.mxu0 0.0
  %414 = vmatpush.msra.mxu0 0.0
  %415 = vmatpush.msra.mxu0 0.0
  %416 = vmatpush.msra.mxu0 0.0
  %417 = vmatpush.msra.mxu0 0.0
  %418 = vmatpush.msra.mxu0 0.0
  %419 = vmatpush.msra.mxu0 0.0
  %420 = vmatpush.msra.mxu0 0.0
  %421 = vmatpush.msra.mxu0 0.0
  %422 = vmatpush.msra.mxu0 %v405
  %423 = vmatmul.f32.gmra.mxu0 %v381
  %v424 = vpop.f32.mrf.mxu0
  %v425 = vadd.f32 0.0, %v424
  %426 = vmatmul.f32.gmra.mxu0 %v384
  %v427 = vpop.f32.mrf.mxu0
  %v428 = vadd.f32 0.0, %v427
  %429 = vmatmul.f32.gmra.mxu0 %v387
  %v430 = vpop.f32.mrf.mxu0
  %v431 = vadd.f32 0.0, %v430
  %432 = vmatmul.f32.gmra.mxu0 %v390
  %v433 = vpop.f32.mrf.mxu0
  %v434 = vadd.f32 0.0, %v433
  %435 = vmatmul.f32.gmra.mxu0 %v393
  %v436 = vpop.f32.mrf.mxu0
  %v437 = vadd.f32 0.0, %v436
  %438 = vmatmul.f32.gmra.mxu0 %v396
  %v439 = vpop.f32.mrf.mxu0
  %v440 = vadd.f32 0.0, %v439
  %441 = vmatmul.f32.gmra.mxu0 %v399
  %v442 = vpop.f32.mrf.mxu0
  %v443 = vadd.f32 0.0, %v442
  %444 = vmatmul.f32.gmra.mxu0 %v402
  %v445 = vpop.f32.mrf.mxu0
  %v446 = vadd.f32 0.0, %v445
  %447 = vdwg.mxu0
  %448 = vmatpush.msra.mxu0 %v198
  %449 = vmatpush.msra.mxu0 %v195
  %450 = vmatpush.msra.mxu0 %v192
  %451 = vmatpush.msra.mxu0 %v189
  %452 = vmatpush.msra.mxu0 %v186
  %453 = vmatpush.msra.mxu0 %v183
  %454 = vmatpush.msra.mxu0 %v180
  %455 = vmatpush.msra.mxu0 %v177
  %456 = vmatpush.msra.mxu0 %v174
  %457 = vmatpush.msra.mxu0 %v171
  %458 = vmatpush.msra.mxu0 %v168
  %459 = vmatpush.msra.mxu0 %v165
  %460 = vmatpush.msra.mxu0 %v162
  %461 = vmatpush.msra.mxu0 %v159
  %462 = vmatpush.msra.mxu0 %v156
  %463 = vmatpush.msra.mxu0 %v150
  %464 = vmatmul.f32.gmra.mxu0 %v338
  %v465 = vpop.f32.mrf.mxu0
  %v466 = vadd.f32 %v425, %v465
  %467 = vmatmul.f32.gmra.mxu0 %v342
  %v468 = vpop.f32.mrf.mxu0
  %v469 = vadd.f32 %v428, %v468
  %470 = vmatmul.f32.gmra.mxu0 %v346
  %v471 = vpop.f32.mrf.mxu0
  %v472 = vadd.f32 %v431, %v471
  %473 = vmatmul.f32.gmra.mxu0 %v350
  %v474 = vpop.f32.mrf.mxu0
  %v475 = vadd.f32 %v434, %v474
  %476 = vmatmul.f32.gmra.mxu0 %v354
  %v477 = vpop.f32.mrf.mxu0
  %v478 = vadd.f32 %v437, %v477
  %479 = vmatmul.f32.gmra.mxu0 %v358
  %v480 = vpop.f32.mrf.mxu0
  %v481 = vadd.f32 %v440, %v480
  %482 = vmatmul.f32.gmra.mxu0 %v362
  %v483 = vpop.f32.mrf.mxu0
  %v484 = vadd.f32 %v443, %v483
  %485 = vmatmul.f32.gmra.mxu0 %v366
  %v486 = vpop.f32.mrf.mxu0
  %v487 = vadd.f32 %v446, %v486
  %488 = vdwg.mxu0
  %489 = vmatpush.msra.mxu0 %v244
  %490 = vmatpush.msra.mxu0 %v241
  %491 = vmatpush.msra.mxu0 %v238
  %492 = vmatpush.msra.mxu0 %v235
  %493 = vmatpush.msra.mxu0 %v232
  %494 = vmatpush.msra.mxu0 %v229
  %495 = vmatpush.msra.mxu0 %v226
  %496 = vmatpush.msra.mxu0 %v223
  %497 = vmatpush.msra.mxu0 %v220
  %498 = vmatpush.msra.mxu0 %v217
  %499 = vmatpush.msra.mxu0 %v214
  %500 = vmatpush.msra.mxu0 %v211
  %501 = vmatpush.msra.mxu0 %v208
  %502 = vmatpush.msra.mxu0 %v205
  %503 = vmatpush.msra.mxu0 %v202
  %504 = vmatpush.msra.mxu0 %v151
  %505 = vmatmul.f32.gmra.mxu0 %v339
  %v506 = vpop.f32.mrf.mxu0
  %v507 = vadd.f32 %v466, %v506
  %508 = vmatmul.f32.gmra.mxu0 %v343
  %v509 = vpop.f32.mrf.mxu0
  %v510 = vadd.f32 %v469, %v509
  %511 = vmatmul.f32.gmra.mxu0 %v347
  %v512 = vpop.f32.mrf.mxu0
  %v513 = vadd.f32 %v472, %v512
  %514 = vmatmul.f32.gmra.mxu0 %v351
  %v515 = vpop.f32.mrf.mxu0
  %v516 = vadd.f32 %v475, %v515
  %517 = vmatmul.f32.gmra.mxu0 %v355
  %v518 = vpop.f32.mrf.mxu0
  %v519 = vadd.f32 %v478, %v518
  %520 = vmatmul.f32.gmra.mxu0 %v359
  %v521 = vpop.f32.mrf.mxu0
  %v522 = vadd.f32 %v481, %v521
  %523 = vmatmul.f32.gmra.mxu0 %v363
  %v524 = vpop.f32.mrf.mxu0
  %v525 = vadd.f32 %v484, %v524
  %526 = vmatmul.f32.gmra.mxu0 %v367
  %v527 = vpop.f32.mrf.mxu0
  %v528 = vadd.f32 %v487, %v527
  %529 = vdwg.mxu0
  %530 = vmatpush.msra.mxu0 %v290
  %531 = vmatpush.msra.mxu0 %v287
  %532 = vmatpush.msra.mxu0 %v284
  %533 = vmatpush.msra.mxu0 %v281
  %534 = vmatpush.msra.mxu0 %v278
  %535 = vmatpush.msra.mxu0 %v275
  %536 = vmatpush.msra.mxu0 %v272
  %537 = vmatpush.msra.mxu0 %v269
  %538 = vmatpush.msra.mxu0 %v266
  %539 = vmatpush.msra.mxu0 %v263
  %540 = vmatpush.msra.mxu0 %v260
  %541 = vmatpush.msra.mxu0 %v257
  %542 = vmatpush.msra.mxu0 %v254
  %543 = vmatpush.msra.mxu0 %v251
  %544 = vmatpush.msra.mxu0 %v248
  %545 = vmatpush.msra.mxu0 %v152
  %546 = vmatmul.f32.gmra.mxu0 %v340
  %v547 = vpop.f32.mrf.mxu0
  %v548 = vadd.f32 %v507, %v547
  %549 = vmatmul.f32.gmra.mxu0 %v344
  %v550 = vpop.f32.mrf.mxu0
  %v551 = vadd.f32 %v510, %v550
  %552 = vmatmul.f32.gmra.mxu0 %v348
  %v553 = vpop.f32.mrf.mxu0
  %v554 = vadd.f32 %v513, %v553
  %555 = vmatmul.f32.gmra.mxu0 %v352
  %v556 = vpop.f32.mrf.mxu0
  %v557 = vadd.f32 %v516, %v556
  %558 = vmatmul.f32.gmra.mxu0 %v356
  %v559 = vpop.f32.mrf.mxu0
  %v560 = vadd.f32 %v519, %v559
  %561 = vmatmul.f32.gmra.mxu0 %v360
  %v562 = vpop.f32.mrf.mxu0
  %v563 = vadd.f32 %v522, %v562
  %564 = vmatmul.f32.gmra.mxu0 %v364
  %v565 = vpop.f32.mrf.mxu0
  %v566 = vadd.f32 %v525, %v565
  %567 = vmatmul.f32.gmra.mxu0 %v368
  %v568 = vpop.f32.mrf.mxu0
  %v569 = vadd.f32 %v528, %v568
  %570 = vdwg.mxu0
  %571 = vmatpush.msra.mxu0 %v336
  %572 = vmatpush.msra.mxu0 %v333
  %573 = vmatpush.msra.mxu0 %v330
  %574 = vmatpush.msra.mxu0 %v327
  %575 = vmatpush.msra.mxu0 %v324
  %576 = vmatpush.msra.mxu0 %v321
  %577 = vmatpush.msra.mxu0 %v318
  %578 = vmatpush.msra.mxu0 %v315
  %579 = vmatpush.msra.mxu0 %v312
  %580 = vmatpush.msra.mxu0 %v309
  %581 = vmatpush.msra.mxu0 %v306
  %582 = vmatpush.msra.mxu0 %v303
  %583 = vmatpush.msra.mxu0 %v300
  %584 = vmatpush.msra.mxu0 %v297
  %585 = vmatpush.msra.mxu0 %v294
  %586 = vmatpush.msra.mxu0 %v153
  %587 = vmatmul.f32.gmra.mxu0 %v341
  %v588 = vpop.f32.mrf.mxu0
  %v589 = vadd.f32 %v548, %v588
  %590 = vmatmul.f32.gmra.mxu0 %v345
  %v591 = vpop.f32.mrf.mxu0
  %v592 = vadd.f32 %v551, %v591
  %593 = vmatmul.f32.gmra.mxu0 %v349
  %v594 = vpop.f32.mrf.mxu0
  %v595 = vadd.f32 %v554, %v594
  %596 = vmatmul.f32.gmra.mxu0 %v353
  %v597 = vpop.f32.mrf.mxu0
  %v598 = vadd.f32 %v557, %v597
  %599 = vmatmul.f32.gmra.mxu0 %v357
  %v600 = vpop.f32.mrf.mxu0
  %v601 = vadd.f32 %v560, %v600
  %602 = vmatmul.f32.gmra.mxu0 %v361
  %v603 = vpop.f32.mrf.mxu0
  %v604 = vadd.f32 %v563, %v603
  %605 = vmatmul.f32.gmra.mxu0 %v365
  %v606 = vpop.f32.mrf.mxu0
  %v607 = vadd.f32 %v566, %v606
  %608 = vmatmul.f32.gmra.mxu0 %v369
  %v609 = vpop.f32.mrf.mxu0
  %v610 = vadd.f32 %v569, %v609
  %611 = vdwg.mxu0
  %v612 = vld [vmem:[%s6] sm:$0xff]
  %v613 = vld [vmem:[%s6 + $0x8] sm:$0xff]
  %v614 = vld [vmem:[%s6 + $0x10] sm:$0xff]
  %v615 = vld [vmem:[%s6 + $0x18] sm:$0xff]
  %v616 = vld [vmem:[%s6 + $0x20] sm:$0xff]
  %v617 = vld [vmem:[%s6 + $0x28] sm:$0xff]
  %v618 = vld [vmem:[%s6 + $0x30] sm:$0xff]
  %v619 = vld [vmem:[%s6 + $0x38] sm:$0xff]
  %621 = vset.pattern.permute.xlu0 0
  %622 = vperm.xlu0 %621, %v612
  %v623 = vpop.permute.xlu0 %622
  %626 = vset.pattern.permute.xlu0 0
  %627 = vperm.xlu0 %626, %v613
  %v628 = vpop.permute.xlu0 %627
  %631 = vset.pattern.permute.xlu0 0
  %632 = vperm.xlu0 %631, %v614
  %v633 = vpop.permute.xlu0 %632
  %636 = vset.pattern.permute.xlu0 0
  %637 = vperm.xlu0 %636, %v615
  %v638 = vpop.permute.xlu0 %637
  %641 = vset.pattern.permute.xlu0 0
  %642 = vperm.xlu0 %641, %v616
  %v643 = vpop.permute.xlu0 %642
  %646 = vset.pattern.permute.xlu0 0
  %647 = vperm.xlu0 %646, %v617
  %v648 = vpop.permute.xlu0 %647
  %651 = vset.pattern.permute.xlu0 0
  %652 = vperm.xlu0 %651, %v618
  %v653 = vpop.permute.xlu0 %652
  %656 = vset.pattern.permute.xlu0 0
  %657 = vperm.xlu0 %656, %v619
  %v658 = vpop.permute.xlu0 %657
  %v660 = vadd.f32 %v589, %v623
  %v661 = vadd.f32 %v592, %v628
  %v662 = vadd.f32 %v595, %v633
  %v663 = vadd.f32 %v598, %v638
  %v664 = vadd.f32 %v601, %v643
  %v665 = vadd.f32 %v604, %v648
  %v666 = vadd.f32 %v607, %v653
  %v667 = vadd.f32 %v610, %v658
  %v668 = vmax.f32 %v660, 0.0
  %v669 = vmax.f32 %v661, 0.0
  %v670 = vmax.f32 %v662, 0.0
  %v671 = vmax.f32 %v663, 0.0
  %v672 = vmax.f32 %v664, 0.0
  %v673 = vmax.f32 %v665, 0.0
  %v674 = vmax.f32 %v666, 0.0
  %v675 = vmax.f32 %v667, 0.0
  %vm676 = vcmask 64512
  %677 = vst.msk [vmem:[%s7] sm:$0xff] %vm676, %v668
  %678 = vst.msk [vmem:[%s7 + $0x8] sm:$0xff] %vm676, %v669
  %679 = vst.msk [vmem:[%s7 + $0x10] sm:$0xff] %vm676, %v670
  %680 = vst.msk [vmem:[%s7 + $0x18] sm:$0xff] %vm676, %v671
  %681 = vst.msk [vmem:[%s7 + $0x20] sm:$0xff] %vm676, %v672
  %682 = vst.msk [vmem:[%s7 + $0x28] sm:$0xff] %vm676, %v673
  %683 = vst.msk [vmem:[%s7 + $0x30] sm:$0xff] %vm676, %v674
  %684 = vst.msk [vmem:[%s7 + $0x38] sm:$0xff] %vm676, %v675
  // Predicated region
  $region30: #{input_multi_block_concat_forward.1} parent=0 // pred_check
    _
  $region31: #{input_multi_block_concat_forward.1} parent=0 // pred_check_branch
    %686 = sbr.rel (0) target = $region33
  $region32: #{input_multi_block_concat_forward.1} parent=0 // pred_region
    _
  $region33: #{input_multi_block_concat_forward.1} parent=0 // pred_fallthru
    _
  // Predicated region
  $region34: #{input_multi_block_concat_forward.1} parent=0 // pred_check
    _
  $region35: #{input_multi_block_concat_forward.1} parent=0 // pred_check_branch
    %688 = sbr.rel (0) target = $region37
  $region36: #{input_multi_block_concat_forward.1} parent=0 // pred_region
    _
  $region37: #{input_multi_block_concat_forward.1} parent=0 // pred_fallthru
    _

</llo_original>
